<compile_context>
chip_gen: v5e
topology: v5e:2x2
jax: 0.10.0
libtpu: 0.0.40
codegen_flags: <defaults>
</compile_context>

<pallas_src>
import functools

import jax
import jax.numpy as jnp
from jax import lax
from jax.experimental import pallas as pl
from jax.experimental.pallas import tpu as pltpu


# ----------------------------------------------------------------------------
# Fused kernel: BN stats (phase 0)  +  FiLM MLP + normalize/modulate (phase 1)
# ----------------------------------------------------------------------------
def film_fused_kernel(t_ref, x_ref, gamma_ref, beta_ref,
                      w1s_ref, b1s_ref, w2s_ref, b2s_ref,
                      w1b_ref, b1b_ref, w2b_ref, b2b_ref,
                      o_ref,
                      sum_sc, sq_sc, g_sc, hc_sc, a_sc, b_sc,
                      *, count, eps):
    # t_ref:  (N,)  f32 in SMEM          x_ref/o_ref: (1, C, T) blocks
    # gamma/beta/b2s/b2b: (C, 1)         w1s/b1s/w1b/b1b: (1, I)
    # w2s/w2b: (C, I)
    # scratch: sum_sc/sq_sc (C, T), g_sc/hc_sc/a_sc/b_sc (C, 1)
    phase = pl.program_id(0)
    n = pl.program_id(1)
    h = pl.program_id(2)
    n_last = pl.num_programs(1) - 1
    h_last = pl.num_programs(2) - 1

    # ---------------- phase 0: batch-norm statistics ----------------
    @pl.when(phase == 0)
    def _stats_pass():
        @pl.when((n == 0) & (h == 0))
        def _():
            sum_sc[...] = jnp.zeros_like(sum_sc)
            sq_sc[...] = jnp.zeros_like(sq_sc)

        xv = x_ref[0].astype(jnp.float32)          # (C, T)
        # per-lane partial accumulation: VPU only, no cross-lane XLU per step
        sum_sc[...] += xv
        sq_sc[...] += xv * xv

        @pl.when((n == n_last) & (h == h_last))
        def _():
            inv_count = 1.0 / count                # python float -> literal
            s = jnp.sum(sum_sc[...], axis=1, keepdims=True)    # (C, 1) single XLU reduce
            ss = jnp.sum(sq_sc[...], axis=1, keepdims=True)
            mean = s * inv_count
            var = jnp.maximum(ss * inv_count - mean * mean, 0.0)   # biased var, clamped >= 0
            rstd = lax.rsqrt(var + eps)
            g = rstd * gamma_ref[...]              # fold BN affine
            g_sc[...] = g
            hc_sc[...] = beta_ref[...] - mean * g

    # ---------------- phase 1: FiLM MLP + apply ----------------
    @pl.when(phase == 1)
    def _apply_pass():
        @pl.when(h == 0)
        def _():
            # tiny per-sample MLP, computed once per batch element on-chip
            tn = t_ref[n]                                          # scalar from SMEM
            hs = w1s_ref[...] * tn + b1s_ref[...]                  # (1, I)
            hb = w1b_ref[...] * tn + b1b_ref[...]                  # (1, I)
            scale_n = jnp.sum(w2s_ref[...] * hs, axis=1, keepdims=True) + b2s_ref[...]  # (C, 1)
            bias_n = jnp.sum(w2b_ref[...] * hb, axis=1, keepdims=True) + b2b_ref[...]   # (C, 1)
            # fold everything: o = x * a + b   (per (n, c))
            a_sc[...] = g_sc[...] * scale_n
            b_sc[...] = hc_sc[...] * scale_n + bias_n

        xv = x_ref[0].astype(jnp.float32)                          # (C, T)
        o_ref[0] = (xv * a_sc[...] + b_sc[...]).astype(o_ref.dtype)


# ----------------------------------------------------------------------------
# Wrapper
# ----------------------------------------------------------------------------
def _pick_hw_tile(HW, C, itemsize, max_block_bytes=2 * 1024 * 1024):
    """Largest lane-dense HW tile (multiple of 128 dividing HW) with a
    (1, C, T) block no bigger than ~max_block_bytes (safe on v7x VMEM)."""
    if C * HW * itemsize <= max_block_bytes:
        return HW
    cap = max(128, (max_block_bytes // (itemsize * C)) // 128 * 128)
    for cand in range(min(cap, HW), 0, -128):
        if HW % cand == 0:
            return cand
    return HW  # HW not a multiple of 128: fall back to full spatial extent


def film_forward(x, timestep, params, eps=1e-5):
    N, C, H, W = x.shape
    HW = H * W
    xf = x.reshape(N, C, HW)
    t = timestep.reshape(-1).astype(jnp.float32)
    assert t.shape[0] == N, "one timestep per batch element"
    I = params["w1s"].shape[0]

    T = _pick_hw_tile(HW, C, jnp.dtype(x.dtype).itemsize)
    HT = HW // T

    # Parameters, laid out lane/sublane-dense for the kernel.
    gamma = params["gamma"].reshape(C, 1).astype(jnp.float32)
    beta = params["beta"].reshape(C, 1).astype(jnp.float32)
    w1s = params["w1s"].reshape(1, I).astype(jnp.float32)   # (I,1) -> (1,I)
    b1s = params["b1s"].reshape(1, I).astype(jnp.float32)
    w2s = params["w2s"].astype(jnp.float32)                 # (C, I)
    b2s = params["b2s"].reshape(C, 1).astype(jnp.float32)
    w1b = params["w1b"].reshape(1, I).astype(jnp.float32)
    b1b = params["b1b"].reshape(1, I).astype(jnp.float32)
    w2b = params["w2b"].astype(jnp.float32)
    b2b = params["b2b"].reshape(C, 1).astype(jnp.float32)

    kernel = functools.partial(
        film_fused_kernel, count=float(N * HW), eps=float(eps))

    const_map = lambda p_, n, h: (0, 0)

    out = pl.pallas_call(
        kernel,
        out_shape=jax.ShapeDtypeStruct((N, C, HW), x.dtype),
        grid=(2, N, HT),
        in_specs=[
            pl.BlockSpec(memory_space=pltpu.MemorySpace.SMEM),        # timestep (N,)
            pl.BlockSpec((1, C, T), lambda p_, n, h: (n, 0, h)),      # x
            pl.BlockSpec((C, 1), const_map),                          # BN gamma
            pl.BlockSpec((C, 1), const_map),                          # BN beta
            pl.BlockSpec((1, I), const_map),                          # inp2lat_scale.weight
            pl.BlockSpec((1, I), const_map),                          # inp2lat_scale.bias
            pl.BlockSpec((C, I), const_map),                          # lat2scale.weight
            pl.BlockSpec((C, 1), const_map),                          # lat2scale.bias
            pl.BlockSpec((1, I), const_map),                          # inp2lat_bias.weight
            pl.BlockSpec((1, I), const_map),                          # inp2lat_bias.bias
            pl.BlockSpec((C, I), const_map),                          # lat2bias.weight
            pl.BlockSpec((C, 1), const_map),                          # lat2bias.bias
        ],
        # During phase 0 the output block index is pinned to (0,0,0) so the
        # (unwritten) output buffer never gets flushed; phase 1 fully rewrites
        # every block exactly once.
        out_specs=pl.BlockSpec((1, C, T), lambda p_, n, h: (p_ * n, 0, p_ * h)),
        scratch_shapes=[
            pltpu.VMEM((C, T), jnp.float32),   # per-lane sum partials
            pltpu.VMEM((C, T), jnp.float32),   # per-lane sumsq partials
            pltpu.VMEM((C, 1), jnp.float32),   # g  = rstd * gamma
            pltpu.VMEM((C, 1), jnp.float32),   # hc = beta - mean * g
            pltpu.VMEM((C, 1), jnp.float32),   # a  = g * scale_n        (per n)
            pltpu.VMEM((C, 1), jnp.float32),   # b  = hc * scale_n + bias_n
        ],
        compiler_params=pltpu.CompilerParams(
            # scratch accumulation carries across all three axes -> sequential
            dimension_semantics=("arbitrary", "arbitrary", "arbitrary"),
            vmem_limit_bytes=32 * 1024 * 1024,
        ),
    )(t, xf, gamma, beta, w1s, b1s, w2s, b2s, w1b, b1b, w2b, b2b)

    # TODO(synk): on v7x a two-level stats reduction (split N over the 2
    # TensorCores with partial outputs) would halve the stats pass.
    return out.reshape(N, C, H, W)


# ----------------------------------------------------------------------------
# Pure-JAX reference (mirrors the PyTorch forward, training-mode BatchNorm2d)
# ----------------------------------------------------------------------------
def film_ref(x, timestep, p, eps=1e-5):
    N, C, H, W = x.shape
    mean = x.mean(axis=(0, 2, 3), keepdims=True)
    var = x.var(axis=(0, 2, 3), keepdims=True)                         # biased
    xn = (x - mean) / jnp.sqrt(var + eps)
    xn = xn * p["gamma"].reshape(1, C, 1, 1) + p["beta"].reshape(1, C, 1, 1)
    t = timestep.reshape(-1, 1).astype(x.dtype)
    scale = (t @ p["w1s"].T + p["b1s"]) @ p["w2s"].T + p["b2s"]
    bias = (t @ p["w1b"].T + p["b1b"]) @ p["w2b"].T + p["b2b"]
    return xn * scale[:, :, None, None] + bias[:, :, None, None]


if __name__ == "__main__":
    N, C, H, W = 2, 4, 16, 16        # channels=4, spatial=16
    I = 128                          # intermediate=128

    key = jax.random.PRNGKey(0)
    ks = jax.random.split(key, 12)
    x = jax.random.normal(ks[0], (N, C, H, W), jnp.float32)
    timestep = jax.random.uniform(ks[1], (N,), jnp.float32)

    # Deterministic synthetic parameters (shapes from FILM.__init__).
    params = {
        "w1s": 0.3 * jax.random.normal(ks[2], (I, 1), jnp.float32),    # inp2lat_sacale.weight
        "b1s": 0.3 * jax.random.normal(ks[3], (I,), jnp.float32),      # inp2lat_sacale.bias
        "w2s": 0.1 * jax.random.normal(ks[4], (C, I), jnp.float32),    # lat2scale.weight
        "b2s": jnp.ones((C,), jnp.float32),                            # lat2scale.bias (=1 in __init__)
        "w1b": 0.3 * jax.random.normal(ks[5], (I, 1), jnp.float32),    # inp2lat_bias.weight
        "b1b": 0.3 * jax.random.normal(ks[6], (I,), jnp.float32),      # inp2lat_bias.bias
        "w2b": 0.1 * jax.random.normal(ks[7], (C, I), jnp.float32),    # lat2bias.weight
        "b2b": jnp.zeros((C,), jnp.float32),                           # lat2bias.bias (=0 in __init__)
        "gamma": jnp.ones((C,), jnp.float32),                          # BatchNorm2d.weight
        "beta": jnp.zeros((C,), jnp.float32),                          # BatchNorm2d.bias
    }

    out = film_forward(x, timestep, params)
    out = jax.block_until_ready(out)

    ref = film_ref(x, timestep, params)
    assert out.shape == (N, C, H, W)
    assert jnp.allclose(out, ref, atol=1e-4, rtol=1e-4), "mismatch vs reference"

    print("KERNEL_OK")
</pallas_src>

<mosaic_0001>
module attributes {stable_mosaic.version = 11 : i64} {
  func.func @film_fused_kernel(%arg0: i32, %arg1: i32, %arg2: i32, %arg3: memref<2xf32, #tpu.memory_space<smem>>, %arg4: memref<1x4x256xf32, #tpu.memory_space<vmem>>, %arg5: memref<4x1xf32, #tpu.memory_space<vmem>>, %arg6: memref<4x1xf32, #tpu.memory_space<vmem>>, %arg7: memref<1x128xf32, #tpu.memory_space<vmem>>, %arg8: memref<1x128xf32, #tpu.memory_space<vmem>>, %arg9: memref<4x128xf32, #tpu.memory_space<vmem>>, %arg10: memref<4x1xf32, #tpu.memory_space<vmem>>, %arg11: memref<1x128xf32, #tpu.memory_space<vmem>>, %arg12: memref<1x128xf32, #tpu.memory_space<vmem>>, %arg13: memref<4x128xf32, #tpu.memory_space<vmem>>, %arg14: memref<4x1xf32, #tpu.memory_space<vmem>>, %arg15: memref<1x4x256xf32, #tpu.memory_space<vmem>>, %arg16: memref<4x256xf32, #tpu.memory_space<vmem>>, %arg17: memref<4x256xf32, #tpu.memory_space<vmem>>, %arg18: memref<4x1xf32, #tpu.memory_space<vmem>>, %arg19: memref<4x1xf32, #tpu.memory_space<vmem>>, %arg20: memref<4x1xf32, #tpu.memory_space<vmem>>, %arg21: memref<4x1xf32, #tpu.memory_space<vmem>>) attributes {dimension_semantics = [#tpu.dimension_semantics<arbitrary>, #tpu.dimension_semantics<arbitrary>, #tpu.dimension_semantics<arbitrary>], iteration_bounds = array<i64: 2, 2, 1>, scalar_prefetch = 0 : i64, scratch_operands = 6 : i64, tpu.core_type = #tpu.core_type<tc>, window_params = [{transform_indices = @transform_0, window_bounds = array<i64: 2>}, {transform_indices = @transform_1, window_bounds = array<i64: 1, 4, 256>}, {pipeline_mode = #tpu.pipeline_mode<synchronous>, transform_indices = @transform_2, window_bounds = array<i64: 4, 1>}, {pipeline_mode = #tpu.pipeline_mode<synchronous>, transform_indices = @transform_3, window_bounds = array<i64: 4, 1>}, {pipeline_mode = #tpu.pipeline_mode<synchronous>, transform_indices = @transform_4, window_bounds = array<i64: 1, 128>}, {pipeline_mode = #tpu.pipeline_mode<synchronous>, transform_indices = @transform_5, window_bounds = array<i64: 1, 128>}, {pipeline_mode = #tpu.pipeline_mode<synchronous>, transform_indices = @transform_6, window_bounds = array<i64: 4, 128>}, {pipeline_mode = #tpu.pipeline_mode<synchronous>, transform_indices = @transform_7, window_bounds = array<i64: 4, 1>}, {pipeline_mode = #tpu.pipeline_mode<synchronous>, transform_indices = @transform_8, window_bounds = array<i64: 1, 128>}, {pipeline_mode = #tpu.pipeline_mode<synchronous>, transform_indices = @transform_9, window_bounds = array<i64: 1, 128>}, {pipeline_mode = #tpu.pipeline_mode<synchronous>, transform_indices = @transform_10, window_bounds = array<i64: 4, 128>}, {pipeline_mode = #tpu.pipeline_mode<synchronous>, transform_indices = @transform_11, window_bounds = array<i64: 4, 1>}, {transform_indices = @transform_12, window_bounds = array<i64: 1, 4, 256>}]} {
    %c0_i32 = arith.constant 0 : i32
    %0 = arith.cmpi eq, %arg0, %c0_i32 : i32
    %1 = arith.extui %0 : i1 to i32
    %c0_i32_0 = arith.constant 0 : i32
    %2 = arith.cmpi ne, %1, %c0_i32_0 : i32
    scf.if %2 {
      %c0_i32_2 = arith.constant 0 : i32
      %6 = arith.cmpi eq, %arg1, %c0_i32_2 : i32
      %c0_i32_3 = arith.constant 0 : i32
      %7 = arith.cmpi eq, %arg2, %c0_i32_3 : i32
      %8 = arith.andi %6, %7 : i1
      %9 = arith.extui %8 : i1 to i32
      %c0_i32_4 = arith.constant 0 : i32
      %10 = arith.cmpi ne, %9, %c0_i32_4 : i32
      scf.if %10 {
        %cst = arith.constant 0.000000e+00 : f32
        %25 = vector.broadcast %cst : f32 to vector<4x256xf32>
        %c0_18 = arith.constant 0 : index
        %c0_19 = arith.constant 0 : index
        %26 = vector.load %arg16[%c0_18, %c0_19] : memref<4x256xf32, #tpu.memory_space<vmem>>, vector<4x256xf32>
        tpu.vector_store %arg16[%c0_18, %c0_19], %25 {strides = array<i32>} : memref<4x256xf32, #tpu.memory_space<vmem>>, vector<4x256xf32>,
        %cst_20 = arith.constant 0.000000e+00 : f32
        %27 = vector.broadcast %cst_20 : f32 to vector<4x256xf32>
        %c0_21 = arith.constant 0 : index
        %c0_22 = arith.constant 0 : index
        %28 = vector.load %arg17[%c0_21, %c0_22] : memref<4x256xf32, #tpu.memory_space<vmem>>, vector<4x256xf32>
        tpu.vector_store %arg17[%c0_21, %c0_22], %27 {strides = array<i32>} : memref<4x256xf32, #tpu.memory_space<vmem>>, vector<4x256xf32>,
      } else {
      }
      %c0 = arith.constant 0 : index
      %c0_5 = arith.constant 0 : index
      %c0_6 = arith.constant 0 : index
      %11 = vector.load %arg4[%c0, %c0_5, %c0_6] : memref<1x4x256xf32, #tpu.memory_space<vmem>>, vector<1x4x256xf32>
      %12 = vector.shape_cast %11 : vector<1x4x256xf32> to vector<4x256xf32>
      %c0_7 = arith.constant 0 : index
      %c0_8 = arith.constant 0 : index
      %13 = vector.load %arg16[%c0_7, %c0_8] : memref<4x256xf32, #tpu.memory_space<vmem>>, vector<4x256xf32>
      %14 = arith.addf %13, %12 : vector<4x256xf32>
      %c0_9 = arith.constant 0 : index
      %c0_10 = arith.constant 0 : index
      %15 = vector.load %arg16[%c0_9, %c0_10] : memref<4x256xf32, #tpu.memory_space<vmem>>, vector<4x256xf32>
      tpu.vector_store %arg16[%c0_9, %c0_10], %14 {strides = array<i32>} : memref<4x256xf32, #tpu.memory_space<vmem>>, vector<4x256xf32>,
      %c0_11 = arith.constant 0 : index
      %c0_12 = arith.constant 0 : index
      %16 = vector.load %arg17[%c0_11, %c0_12] : memref<4x256xf32, #tpu.memory_space<vmem>>, vector<4x256xf32>
      %17 = arith.mulf %12, %12 : vector<4x256xf32>
      %18 = arith.addf %16, %17 : vector<4x256xf32>
      %c0_13 = arith.constant 0 : index
      %c0_14 = arith.constant 0 : index
      %19 = vector.load %arg17[%c0_13, %c0_14] : memref<4x256xf32, #tpu.memory_space<vmem>>, vector<4x256xf32>
      tpu.vector_store %arg17[%c0_13, %c0_14], %18 {strides = array<i32>} : memref<4x256xf32, #tpu.memory_space<vmem>>, vector<4x256xf32>,
      %c1_i32_15 = arith.constant 1 : i32
      %20 = arith.cmpi eq, %arg1, %c1_i32_15 : i32
      %c0_i32_16 = arith.constant 0 : i32
      %21 = arith.cmpi eq, %arg2, %c0_i32_16 : i32
      %22 = arith.andi %20, %21 : i1
      %23 = arith.extui %22 : i1 to i32
      %c0_i32_17 = arith.constant 0 : i32
      %24 = arith.cmpi ne, %23, %c0_i32_17 : i32
      scf.if %24 {
        %c0_18 = arith.constant 0 : index
        %c0_19 = arith.constant 0 : index
        %25 = vector.load %arg16[%c0_18, %c0_19] : memref<4x256xf32, #tpu.memory_space<vmem>>, vector<4x256xf32>
        %cst = arith.constant dense<0.000000e+00> : vector<4xf32>
        %26 = vector.multi_reduction <add>, %25, %cst [1] : vector<4x256xf32> to vector<4xf32>
        %27 = vector.shape_cast %26 : vector<4xf32> to vector<4x1xf32>
        %c0_20 = arith.constant 0 : index
        %c0_21 = arith.constant 0 : index
        %28 = vector.load %arg17[%c0_20, %c0_21] : memref<4x256xf32, #tpu.memory_space<vmem>>, vector<4x256xf32>
        %cst_22 = arith.constant dense<0.000000e+00> : vector<4xf32>
        %29 = vector.multi_reduction <add>, %28, %cst_22 [1] : vector<4x256xf32> to vector<4xf32>
        %30 = vector.shape_cast %29 : vector<4xf32> to vector<4x1xf32>
        %cst_23 = arith.constant 0.001953125 : f32
        %31 = vector.broadcast %cst_23 : f32 to vector<4x1xf32>
        %32 = arith.mulf %27, %31 : vector<4x1xf32>
        %cst_24 = arith.constant 0.001953125 : f32
        %33 = vector.broadcast %cst_24 : f32 to vector<4x1xf32>
        %34 = arith.mulf %30, %33 : vector<4x1xf32>
        %35 = arith.mulf %32, %32 : vector<4x1xf32>
        %36 = arith.subf %34, %35 : vector<4x1xf32>
        %cst_25 = arith.constant 0.000000e+00 : f32
        %37 = vector.broadcast %cst_25 : f32 to vector<4x1xf32>
        %38 = arith.maximumf %36, %37 : vector<4x1xf32>
        %cst_26 = arith.constant 9.99999974E-6 : f32
        %39 = vector.broadcast %cst_26 : f32 to vector<4x1xf32>
        %40 = arith.addf %38, %39 : vector<4x1xf32>
        %41 = math.rsqrt %40 : vector<4x1xf32>
        %c0_27 = arith.constant 0 : index
        %c0_28 = arith.constant 0 : index
        %42 = vector.load %arg5[%c0_27, %c0_28] : memref<4x1xf32, #tpu.memory_space<vmem>>, vector<4x1xf32>
        %43 = arith.mulf %41, %42 : vector<4x1xf32>
        %c0_29 = arith.constant 0 : index
        %c0_30 = arith.constant 0 : index
        %44 = vector.load %arg18[%c0_29, %c0_30] : memref<4x1xf32, #tpu.memory_space<vmem>>, vector<4x1xf32>
        tpu.vector_store %arg18[%c0_29, %c0_30], %43 {strides = array<i32>} : memref<4x1xf32, #tpu.memory_space<vmem>>, vector<4x1xf32>,
        %c0_31 = arith.constant 0 : index
        %c0_32 = arith.constant 0 : index
        %45 = vector.load %arg6[%c0_31, %c0_32] : memref<4x1xf32, #tpu.memory_space<vmem>>, vector<4x1xf32>
        %46 = arith.mulf %32, %43 : vector<4x1xf32>
        %47 = arith.subf %45, %46 : vector<4x1xf32>
        %c0_33 = arith.constant 0 : index
        %c0_34 = arith.constant 0 : index
        %48 = vector.load %arg19[%c0_33, %c0_34] : memref<4x1xf32, #tpu.memory_space<vmem>>, vector<4x1xf32>
        tpu.vector_store %arg19[%c0_33, %c0_34], %47 {strides = array<i32>} : memref<4x1xf32, #tpu.memory_space<vmem>>, vector<4x1xf32>,
      } else {
      }
    } else {
    }
    %c1_i32 = arith.constant 1 : i32
    %3 = arith.cmpi eq, %arg0, %c1_i32 : i32
    %4 = arith.extui %3 : i1 to i32
    %c0_i32_1 = arith.constant 0 : i32
    %5 = arith.cmpi ne, %4, %c0_i32_1 : i32
    scf.if %5 {
      %c0_i32_2 = arith.constant 0 : i32
      %6 = arith.cmpi eq, %arg2, %c0_i32_2 : i32
      %7 = arith.extui %6 : i1 to i32
      %c0_i32_3 = arith.constant 0 : i32
      %8 = arith.cmpi ne, %7, %c0_i32_3 : i32
      scf.if %8 {
        %20 = arith.index_cast %arg1 : i32 to index
        %21 = memref.load %arg3[%20] : memref<2xf32, #tpu.memory_space<smem>>
        %c0_13 = arith.constant 0 : index
        %c0_14 = arith.constant 0 : index
        %22 = vector.load %arg7[%c0_13, %c0_14] : memref<1x128xf32, #tpu.memory_space<vmem>>, vector<1x128xf32>
        %23 = vector.broadcast %21 : f32 to vector<1x128xf32>
        %24 = arith.mulf %22, %23 : vector<1x128xf32>
        %c0_15 = arith.constant 0 : index
        %c0_16 = arith.constant 0 : index
        %25 = vector.load %arg8[%c0_15, %c0_16] : memref<1x128xf32, #tpu.memory_space<vmem>>, vector<1x128xf32>
        %26 = arith.addf %24, %25 : vector<1x128xf32>
        %c0_17 = arith.constant 0 : index
        %c0_18 = arith.constant 0 : index
        %27 = vector.load %arg11[%c0_17, %c0_18] : memref<1x128xf32, #tpu.memory_space<vmem>>, vector<1x128xf32>
        %28 = vector.broadcast %21 : f32 to vector<1x128xf32>
        %29 = arith.mulf %27, %28 : vector<1x128xf32>
        %c0_19 = arith.constant 0 : index
        %c0_20 = arith.constant 0 : index
        %30 = vector.load %arg12[%c0_19, %c0_20] : memref<1x128xf32, #tpu.memory_space<vmem>>, vector<1x128xf32>
        %31 = arith.addf %29, %30 : vector<1x128xf32>
        %c0_21 = arith.constant 0 : index
        %c0_22 = arith.constant 0 : index
        %32 = vector.load %arg9[%c0_21, %c0_22] : memref<4x128xf32, #tpu.memory_space<vmem>>, vector<4x128xf32>
        %33 = vector.broadcast %26 : vector<1x128xf32> to vector<4x128xf32>
        %34 = arith.mulf %32, %33 : vector<4x128xf32>
        %cst = arith.constant dense<0.000000e+00> : vector<4xf32>
        %35 = vector.multi_reduction <add>, %34, %cst [1] : vector<4x128xf32> to vector<4xf32>
        %36 = vector.shape_cast %35 : vector<4xf32> to vector<4x1xf32>
        %c0_23 = arith.constant 0 : index
        %c0_24 = arith.constant 0 : index
        %37 = vector.load %arg10[%c0_23, %c0_24] : memref<4x1xf32, #tpu.memory_space<vmem>>, vector<4x1xf32>
        %38 = arith.addf %36, %37 : vector<4x1xf32>
        %c0_25 = arith.constant 0 : index
        %c0_26 = arith.constant 0 : index
        %39 = vector.load %arg13[%c0_25, %c0_26] : memref<4x128xf32, #tpu.memory_space<vmem>>, vector<4x128xf32>
        %40 = vector.broadcast %31 : vector<1x128xf32> to vector<4x128xf32>
        %41 = arith.mulf %39, %40 : vector<4x128xf32>
        %cst_27 = arith.constant dense<0.000000e+00> : vector<4xf32>
        %42 = vector.multi_reduction <add>, %41, %cst_27 [1] : vector<4x128xf32> to vector<4xf32>
        %43 = vector.shape_cast %42 : vector<4xf32> to vector<4x1xf32>
        %c0_28 = arith.constant 0 : index
        %c0_29 = arith.constant 0 : index
        %44 = vector.load %arg14[%c0_28, %c0_29] : memref<4x1xf32, #tpu.memory_space<vmem>>, vector<4x1xf32>
        %45 = arith.addf %43, %44 : vector<4x1xf32>
        %c0_30 = arith.constant 0 : index
        %c0_31 = arith.constant 0 : index
        %46 = vector.load %arg18[%c0_30, %c0_31] : memref<4x1xf32, #tpu.memory_space<vmem>>, vector<4x1xf32>
        %47 = arith.mulf %46, %38 : vector<4x1xf32>
        %c0_32 = arith.constant 0 : index
        %c0_33 = arith.constant 0 : index
        %48 = vector.load %arg20[%c0_32, %c0_33] : memref<4x1xf32, #tpu.memory_space<vmem>>, vector<4x1xf32>
        tpu.vector_store %arg20[%c0_32, %c0_33], %47 {strides = array<i32>} : memref<4x1xf32, #tpu.memory_space<vmem>>, vector<4x1xf32>,
        %c0_34 = arith.constant 0 : index
        %c0_35 = arith.constant 0 : index
        %49 = vector.load %arg19[%c0_34, %c0_35] : memref<4x1xf32, #tpu.memory_space<vmem>>, vector<4x1xf32>
        %50 = arith.mulf %49, %38 : vector<4x1xf32>
        %51 = arith.addf %50, %45 : vector<4x1xf32>
        %c0_36 = arith.constant 0 : index
        %c0_37 = arith.constant 0 : index
        %52 = vector.load %arg21[%c0_36, %c0_37] : memref<4x1xf32, #tpu.memory_space<vmem>>, vector<4x1xf32>
        tpu.vector_store %arg21[%c0_36, %c0_37], %51 {strides = array<i32>} : memref<4x1xf32, #tpu.memory_space<vmem>>, vector<4x1xf32>,
      } else {
      }
      %c0 = arith.constant 0 : index
      %c0_4 = arith.constant 0 : index
      %c0_5 = arith.constant 0 : index
      %9 = vector.load %arg4[%c0, %c0_4, %c0_5] : memref<1x4x256xf32, #tpu.memory_space<vmem>>, vector<1x4x256xf32>
      %10 = vector.shape_cast %9 : vector<1x4x256xf32> to vector<4x256xf32>
      %c0_6 = arith.constant 0 : index
      %c0_7 = arith.constant 0 : index
      %11 = vector.load %arg20[%c0_6, %c0_7] : memref<4x1xf32, #tpu.memory_space<vmem>>, vector<4x1xf32>
      %12 = vector.broadcast %11 : vector<4x1xf32> to vector<4x256xf32>
      %13 = arith.mulf %10, %12 : vector<4x256xf32>
      %c0_8 = arith.constant 0 : index
      %c0_9 = arith.constant 0 : index
      %14 = vector.load %arg21[%c0_8, %c0_9] : memref<4x1xf32, #tpu.memory_space<vmem>>, vector<4x1xf32>
      %15 = vector.broadcast %14 : vector<4x1xf32> to vector<4x256xf32>
      %16 = arith.addf %13, %15 : vector<4x256xf32>
      %c0_10 = arith.constant 0 : index
      %c0_11 = arith.constant 0 : index
      %c0_12 = arith.constant 0 : index
      %17 = vector.load %arg15[%c0_10, %c0_11, %c0_12] : memref<1x4x256xf32, #tpu.memory_space<vmem>>, vector<1x4x256xf32>
      %18 = vector.shape_cast %17 : vector<1x4x256xf32> to vector<4x256xf32>
      %19 = vector.shape_cast %16 : vector<4x256xf32> to vector<1x4x256xf32>
      tpu.vector_store %arg15[%c0_10, %c0_11, %c0_12], %19 {strides = array<i32>} : memref<1x4x256xf32, #tpu.memory_space<vmem>>, vector<1x4x256xf32>,
    } else {
    }
    return
  }
  func.func @transform_0(%arg0: i32, %arg1: i32, %arg2: i32) -> i32 {
    %c0_i32 = arith.constant 0 : i32
    %c0_i32_0 = arith.constant 0 : i32
    return %c0_i32 : i32
  }
  func.func @transform_1(%arg0: i32, %arg1: i32, %arg2: i32) -> (i32, i32, i32) {
    %c0_i32 = arith.constant 0 : i32
    %c0_i32_0 = arith.constant 0 : i32
    return %arg1, %c0_i32, %arg2 : i32, i32, i32
  }
  func.func @transform_2(%arg0: i32, %arg1: i32, %arg2: i32) -> (i32, i32) {
    %c0_i32 = arith.constant 0 : i32
    %c0_i32_0 = arith.constant 0 : i32
    %c0_i32_1 = arith.constant 0 : i32
    return %c0_i32, %c0_i32_0 : i32, i32
  }
  func.func @transform_3(%arg0: i32, %arg1: i32, %arg2: i32) -> (i32, i32) {
    %c0_i32 = arith.constant 0 : i32
    %c0_i32_0 = arith.constant 0 : i32
    %c0_i32_1 = arith.constant 0 : i32
    return %c0_i32, %c0_i32_0 : i32, i32
  }
  func.func @transform_4(%arg0: i32, %arg1: i32, %arg2: i32) -> (i32, i32) {
    %c0_i32 = arith.constant 0 : i32
    %c0_i32_0 = arith.constant 0 : i32
    %c0_i32_1 = arith.constant 0 : i32
    return %c0_i32, %c0_i32_0 : i32, i32
  }
  func.func @transform_5(%arg0: i32, %arg1: i32, %arg2: i32) -> (i32, i32) {
    %c0_i32 = arith.constant 0 : i32
    %c0_i32_0 = arith.constant 0 : i32
    %c0_i32_1 = arith.constant 0 : i32
    return %c0_i32, %c0_i32_0 : i32, i32
  }
  func.func @transform_6(%arg0: i32, %arg1: i32, %arg2: i32) -> (i32, i32) {
    %c0_i32 = arith.constant 0 : i32
    %c0_i32_0 = arith.constant 0 : i32
    %c0_i32_1 = arith.constant 0 : i32
    return %c0_i32, %c0_i32_0 : i32, i32
  }
  func.func @transform_7(%arg0: i32, %arg1: i32, %arg2: i32) -> (i32, i32) {
    %c0_i32 = arith.constant 0 : i32
    %c0_i32_0 = arith.constant 0 : i32
    %c0_i32_1 = arith.constant 0 : i32
    return %c0_i32, %c0_i32_0 : i32, i32
  }
  func.func @transform_8(%arg0: i32, %arg1: i32, %arg2: i32) -> (i32, i32) {
    %c0_i32 = arith.constant 0 : i32
    %c0_i32_0 = arith.constant 0 : i32
    %c0_i32_1 = arith.constant 0 : i32
    return %c0_i32, %c0_i32_0 : i32, i32
  }
  func.func @transform_9(%arg0: i32, %arg1: i32, %arg2: i32) -> (i32, i32) {
    %c0_i32 = arith.constant 0 : i32
    %c0_i32_0 = arith.constant 0 : i32
    %c0_i32_1 = arith.constant 0 : i32
    return %c0_i32, %c0_i32_0 : i32, i32
  }
  func.func @transform_10(%arg0: i32, %arg1: i32, %arg2: i32) -> (i32, i32) {
    %c0_i32 = arith.constant 0 : i32
    %c0_i32_0 = arith.constant 0 : i32
    %c0_i32_1 = arith.constant 0 : i32
    return %c0_i32, %c0_i32_0 : i32, i32
  }
  func.func @transform_11(%arg0: i32, %arg1: i32, %arg2: i32) -> (i32, i32) {
    %c0_i32 = arith.constant 0 : i32
    %c0_i32_0 = arith.constant 0 : i32
    %c0_i32_1 = arith.constant 0 : i32
    return %c0_i32, %c0_i32_0 : i32, i32
  }
  func.func @transform_12(%arg0: i32, %arg1: i32, %arg2: i32) -> (i32, i32, i32) {
    %0 = arith.muli %arg0, %arg1 : i32
    %1 = arith.muli %arg0, %arg2 : i32
    %c0_i32 = arith.constant 0 : i32
    %c0_i32_0 = arith.constant 0 : i32
    return %0, %c0_i32, %1 : i32, i32, i32
  }
}

</mosaic_0001>

<llo_original>
// kernel: tpu_custom_call.1
$region0: #{tpu_custom_call.1}
  #allocation0 [shape = 'u32[]', space=smem, size = 0x4, offset = 0x4, fixed_abs, tag = 'smem constant byte address 0x4 - core index']
  #allocation1 [shape = 'u32[72,128]{1,0:T(1,128)}', space=vmem, size = 0x9000, scoped, tag = 'internal scratch']
  #allocation2 [shape = 'f32[4,256]{1,0:T(4,128)}', space=vmem, size = 0x1000, scoped, tag = 'scratch operand']
  #allocation3 [shape = 'f32[4,256]{1,0:T(4,128)}', space=vmem, size = 0x1000, scoped, tag = 'scratch operand']
  #allocation4 [shape = 'f32[4,1]{1,0:T(4,128)}', space=vmem, size = 0x800, scoped, tag = 'scratch operand']
  #allocation5 [shape = 'f32[4,1]{1,0:T(4,128)}', space=vmem, size = 0x800, scoped, tag = 'scratch operand']
  #allocation6 [shape = 'f32[4,1]{1,0:T(4,128)}', space=vmem, size = 0x800, scoped, tag = 'scratch operand']
  #allocation7 [shape = 'f32[4,1]{1,0:T(4,128)}', space=vmem, size = 0x800, scoped, tag = 'scratch operand']
  %s0 = inlined_call_operand.vmem [shape: f32[2], index: 0, kind: input, shape index: {}]
  %s1 = inlined_call_operand.hbm [shape: f32[2,4,256], index: 1, kind: input, shape index: {}]
  %s2 = inlined_call_operand.vmem [shape: f32[4,1], index: 2, kind: input, shape index: {}]
  %s3 = inlined_call_operand.vmem [shape: f32[4,1], index: 3, kind: input, shape index: {}]
  %s4 = inlined_call_operand.vmem [shape: f32[1,128], index: 4, kind: input, shape index: {}]
  %s5 = inlined_call_operand.vmem [shape: f32[1,128], index: 5, kind: input, shape index: {}]
  %s6 = inlined_call_operand.vmem [shape: f32[4,128], index: 6, kind: input, shape index: {}]
  %s7 = inlined_call_operand.vmem [shape: f32[4,1], index: 7, kind: input, shape index: {}]
  %s8 = inlined_call_operand.vmem [shape: f32[1,128], index: 8, kind: input, shape index: {}]
  %s9 = inlined_call_operand.vmem [shape: f32[1,128], index: 9, kind: input, shape index: {}]
  %s10 = inlined_call_operand.vmem [shape: f32[4,128], index: 10, kind: input, shape index: {}]
  %s11 = inlined_call_operand.vmem [shape: f32[4,1], index: 11, kind: input, shape index: {}]
  %s12 = inlined_call_operand.hbm [shape: f32[2,4,256], index: 12, kind: output, shape index: {}]
  %s13 = sld [smem:[#allocation0]]
  $region109: #{tpu_custom_call.1} parent=0
    _
  %s15 = ssub.s32 1, %s13
  %s16 = scalar_select 0, %s15, %s13
  $region1: #{tpu_custom_call.1} parent=0
    #allocation8 [shape = 'u8[512]{0}', space=smem, size = 0x200, scoped, tag = 'input window, operand 0, single buffered']
    #allocation9 [shape = 's32[2]{0}', space=sflag, size = 0x8, scoped, tag = 'scoped memory for tpu_custom_call.1']
    #allocation10 [shape = 's32[2]{0}', space=sflag, size = 0x8, scoped, tag = 'scoped memory for tpu_custom_call.1']
    #allocation11 [shape = 's32[2]{0}', space=sflag, size = 0x8, scoped, tag = 'scoped memory for tpu_custom_call.1']
    #allocation12 [shape = 'u8[8192]{0}', space=vmem, size = 0x2000, scoped, tag = 'input window, operand 1']
    #allocation13 [shape = 'u8[8192]{0}', space=vmem, size = 0x2000, scoped, tag = 'output window, operand 0']
    %17 = vsyncpa [#allocation11], 0
    %18 = vsyncpa [#allocation9], 0
    %s19 = scalar_lea.sflag [#allocation9], 1
    %20 = vsyncpa %s19, 0
    %21 = vsyncpa [#allocation10], 0
    %s22 = scalar_lea.sflag [#allocation10], 1
    %23 = vsyncpa %s22, 0
    loop: start=0, step=1, limit=6
    $region2: #{tpu_custom_call.1} parent=1 // loop_pre_header
      _
    $region3: #{tpu_custom_call.1} parent=1 // loop_header
      %s25 = sphi 0, %s29
      %p26 = scmp.ge.s32.totalorder %s25, 6
      %s32 = sphi 0, %s51
      %s33 = sphi 0, %s47
      %s34 = sphi 0, %s43
      %s35 = sphi 0, %s32
      %s36 = sphi 0, %s33
      %s37 = sphi 0, %s34
      %s38 = sphi 0, %s35
      %s39 = sphi 0, %s36
      %s40 = sphi 0, %s37
      %s52 = sphi 0, %s52
      %s54 = sphi 0, %s52
      %s55 = sphi 0, %s54
      %s69 = sphi 0, %s55
      %s77 = sphi 0, %s79
      %s80 = sphi 0, %s77
      %s81 = sphi 0, %s80
      %s97 = sphi 0, %s81
      %s101 = sphi 0, %s101
      %s103 = sphi 0, %s101
      %s104 = sphi 0, %s103
      %s118 = sphi 0, %s104
      %s122 = sphi 0, %s122
      %s124 = sphi 0, %s122
      %s125 = sphi 0, %s124
      %s139 = sphi 0, %s125
      %s143 = sphi 0, %s143
      %s145 = sphi 0, %s143
      %s146 = sphi 0, %s145
      %s160 = sphi 0, %s146
      %s164 = sphi 0, %s164
      %s166 = sphi 0, %s164
      %s167 = sphi 0, %s166
      %s181 = sphi 0, %s167
      %s185 = sphi 0, %s185
      %s187 = sphi 0, %s185
      %s188 = sphi 0, %s187
      %s202 = sphi 0, %s188
      %s206 = sphi 0, %s206
      %s208 = sphi 0, %s206
      %s209 = sphi 0, %s208
      %s223 = sphi 0, %s209
      %s227 = sphi 0, %s227
      %s229 = sphi 0, %s227
      %s230 = sphi 0, %s229
      %s244 = sphi 0, %s230
      %s248 = sphi 0, %s248
      %s250 = sphi 0, %s248
      %s251 = sphi 0, %s250
      %s265 = sphi 0, %s251
      %s269 = sphi 0, %s269
      %s271 = sphi 0, %s269
      %s272 = sphi 0, %s271
      %s286 = sphi 0, %s272
      %s290 = sphi 0, %s290
      %s292 = sphi 0, %s290
      %s293 = sphi 0, %s292
      %s307 = sphi 0, %s293
      %s319 = sphi 0, %s321
      %s322 = sphi 0, %s319
      %s323 = sphi 0, %s322
      %s339 = sphi 0, %s323
    $region4: #{tpu_custom_call.1} parent=1 // loop_header_branch
      %28 = sbr.rel (%p26) target = $region8
    $region5: #{tpu_custom_call.1} parent=1 // loop_body
      %s30 = ssub.s32 %s25, 1
      %s31 = ssub.s32 %s25, 2
      %s41 = sadd.s32 1, %s34
      %p42 = scmp.ge.s32.totalorder %s41, 1
      %s43 = scalar_select %p42, 0, %s41
      %s44 = sadd.s32 1, %s33
      %s45 = scalar_select %p42, %s44, %s33
      %p46 = scmp.ge.s32.totalorder %s45, 2
      %s47 = scalar_select %p46, 0, %s45
      %s48 = sadd.s32 1, %s32
      %s49 = scalar_select %p46, %s48, %s32
      %p50 = scmp.ge.s32.totalorder %s49, 2
      %s51 = scalar_select %p50, 0, %s49
      %s53 = sadd.s32 %s52, 1
      %p56 = scmp.eq.s32.totalorder %s25, 3
      %p57 = scmp.ne.s32.totalorder %s52, %s54
      %p58 = scmp.eq.s32.totalorder %s25, 0
      %p59 = por %p57, %p58
      %p60 = scmp.ne.s32.totalorder %s52, %s54
      %p61 = scmp.eq.s32.totalorder %s30, 3
      %p62 = por %p60, %p61
      %p63 = scmp.ne.s32.totalorder %s54, %s55
      %p64 = scmp.eq.s32.totalorder %s30, 0
      %p65 = por %p63, %p64
      %p66 = scmp.ne.s32.totalorder %s54, %s55
      %p67 = scmp.eq.s32.totalorder %s31, 3
      %p68 = por %p66, %p67
      %p70 = scmp.ne.s32.totalorder %s55, %s69
      %p71 = scmp.eq.s32.totalorder %s31, 0
      %p72 = por %p70, %p71
      %s73 = ssub.s32 %s33, %s47
      %s74 = ssub.s32 %s34, %s43
      %s75 = sor.u32 %s73, %s74
      %p76 = scmp.eq.s32.totalorder %s75, 0
      %s78 = sadd.s32 %s77, 1
      %s79 = scalar_select %p76, %s77, %s78
      %p82 = pneg %p76
      %p83 = scmp.eq.s32.totalorder %s25, 3
      %p84 = por %p82, %p83
      %p85 = scmp.ne.s32.totalorder %s77, %s80
      %p86 = scmp.eq.s32.totalorder %s25, 0
      %p87 = por %p85, %p86
      %p88 = scmp.ne.s32.totalorder %s77, %s80
      %p89 = scmp.eq.s32.totalorder %s30, 3
      %p90 = por %p88, %p89
      %p91 = scmp.ne.s32.totalorder %s80, %s81
      %p92 = scmp.eq.s32.totalorder %s30, 0
      %p93 = por %p91, %p92
      %p94 = scmp.ne.s32.totalorder %s80, %s81
      %p95 = scmp.eq.s32.totalorder %s31, 3
      %p96 = por %p94, %p95
      %p98 = scmp.ne.s32.totalorder %s81, %s97
      %p99 = scmp.eq.s32.totalorder %s31, 0
      %p100 = por %p98, %p99
      %s102 = sadd.s32 %s101, 1
      %p105 = scmp.eq.s32.totalorder %s25, 3
      %p106 = scmp.ne.s32.totalorder %s101, %s103
      %p107 = scmp.eq.s32.totalorder %s25, 0
      %p108 = por %p106, %p107
      %p109 = scmp.ne.s32.totalorder %s101, %s103
      %p110 = scmp.eq.s32.totalorder %s30, 3
      %p111 = por %p109, %p110
      %p112 = scmp.ne.s32.totalorder %s103, %s104
      %p113 = scmp.eq.s32.totalorder %s30, 0
      %p114 = por %p112, %p113
      %p115 = scmp.ne.s32.totalorder %s103, %s104
      %p116 = scmp.eq.s32.totalorder %s31, 3
      %p117 = por %p115, %p116
      %p119 = scmp.ne.s32.totalorder %s104, %s118
      %p120 = scmp.eq.s32.totalorder %s31, 0
      %p121 = por %p119, %p120
      %s123 = sadd.s32 %s122, 1
      %p126 = scmp.eq.s32.totalorder %s25, 3
      %p127 = scmp.ne.s32.totalorder %s122, %s124
      %p128 = scmp.eq.s32.totalorder %s25, 0
      %p129 = por %p127, %p128
      %p130 = scmp.ne.s32.totalorder %s122, %s124
      %p131 = scmp.eq.s32.totalorder %s30, 3
      %p132 = por %p130, %p131
      %p133 = scmp.ne.s32.totalorder %s124, %s125
      %p134 = scmp.eq.s32.totalorder %s30, 0
      %p135 = por %p133, %p134
      %p136 = scmp.ne.s32.totalorder %s124, %s125
      %p137 = scmp.eq.s32.totalorder %s31, 3
      %p138 = por %p136, %p137
      %p140 = scmp.ne.s32.totalorder %s125, %s139
      %p141 = scmp.eq.s32.totalorder %s31, 0
      %p142 = por %p140, %p141
      %s144 = sadd.s32 %s143, 1
      %p147 = scmp.eq.s32.totalorder %s25, 3
      %p148 = scmp.ne.s32.totalorder %s143, %s145
      %p149 = scmp.eq.s32.totalorder %s25, 0
      %p150 = por %p148, %p149
      %p151 = scmp.ne.s32.totalorder %s143, %s145
      %p152 = scmp.eq.s32.totalorder %s30, 3
      %p153 = por %p151, %p152
      %p154 = scmp.ne.s32.totalorder %s145, %s146
      %p155 = scmp.eq.s32.totalorder %s30, 0
      %p156 = por %p154, %p155
      %p157 = scmp.ne.s32.totalorder %s145, %s146
      %p158 = scmp.eq.s32.totalorder %s31, 3
      %p159 = por %p157, %p158
      %p161 = scmp.ne.s32.totalorder %s146, %s160
      %p162 = scmp.eq.s32.totalorder %s31, 0
      %p163 = por %p161, %p162
      %s165 = sadd.s32 %s164, 1
      %p168 = scmp.eq.s32.totalorder %s25, 3
      %p169 = scmp.ne.s32.totalorder %s164, %s166
      %p170 = scmp.eq.s32.totalorder %s25, 0
      %p171 = por %p169, %p170
      %p172 = scmp.ne.s32.totalorder %s164, %s166
      %p173 = scmp.eq.s32.totalorder %s30, 3
      %p174 = por %p172, %p173
      %p175 = scmp.ne.s32.totalorder %s166, %s167
      %p176 = scmp.eq.s32.totalorder %s30, 0
      %p177 = por %p175, %p176
      %p178 = scmp.ne.s32.totalorder %s166, %s167
      %p179 = scmp.eq.s32.totalorder %s31, 3
      %p180 = por %p178, %p179
      %p182 = scmp.ne.s32.totalorder %s167, %s181
      %p183 = scmp.eq.s32.totalorder %s31, 0
      %p184 = por %p182, %p183
      %s186 = sadd.s32 %s185, 1
      %p189 = scmp.eq.s32.totalorder %s25, 3
      %p190 = scmp.ne.s32.totalorder %s185, %s187
      %p191 = scmp.eq.s32.totalorder %s25, 0
      %p192 = por %p190, %p191
      %p193 = scmp.ne.s32.totalorder %s185, %s187
      %p194 = scmp.eq.s32.totalorder %s30, 3
      %p195 = por %p193, %p194
      %p196 = scmp.ne.s32.totalorder %s187, %s188
      %p197 = scmp.eq.s32.totalorder %s30, 0
      %p198 = por %p196, %p197
      %p199 = scmp.ne.s32.totalorder %s187, %s188
      %p200 = scmp.eq.s32.totalorder %s31, 3
      %p201 = por %p199, %p200
      %p203 = scmp.ne.s32.totalorder %s188, %s202
      %p204 = scmp.eq.s32.totalorder %s31, 0
      %p205 = por %p203, %p204
      %s207 = sadd.s32 %s206, 1
      %p210 = scmp.eq.s32.totalorder %s25, 3
      %p211 = scmp.ne.s32.totalorder %s206, %s208
      %p212 = scmp.eq.s32.totalorder %s25, 0
      %p213 = por %p211, %p212
      %p214 = scmp.ne.s32.totalorder %s206, %s208
      %p215 = scmp.eq.s32.totalorder %s30, 3
      %p216 = por %p214, %p215
      %p217 = scmp.ne.s32.totalorder %s208, %s209
      %p218 = scmp.eq.s32.totalorder %s30, 0
      %p219 = por %p217, %p218
      %p220 = scmp.ne.s32.totalorder %s208, %s209
      %p221 = scmp.eq.s32.totalorder %s31, 3
      %p222 = por %p220, %p221
      %p224 = scmp.ne.s32.totalorder %s209, %s223
      %p225 = scmp.eq.s32.totalorder %s31, 0
      %p226 = por %p224, %p225
      %s228 = sadd.s32 %s227, 1
      %p231 = scmp.eq.s32.totalorder %s25, 3
      %p232 = scmp.ne.s32.totalorder %s227, %s229
      %p233 = scmp.eq.s32.totalorder %s25, 0
      %p234 = por %p232, %p233
      %p235 = scmp.ne.s32.totalorder %s227, %s229
      %p236 = scmp.eq.s32.totalorder %s30, 3
      %p237 = por %p235, %p236
      %p238 = scmp.ne.s32.totalorder %s229, %s230
      %p239 = scmp.eq.s32.totalorder %s30, 0
      %p240 = por %p238, %p239
      %p241 = scmp.ne.s32.totalorder %s229, %s230
      %p242 = scmp.eq.s32.totalorder %s31, 3
      %p243 = por %p241, %p242
      %p245 = scmp.ne.s32.totalorder %s230, %s244
      %p246 = scmp.eq.s32.totalorder %s31, 0
      %p247 = por %p245, %p246
      %s249 = sadd.s32 %s248, 1
      %p252 = scmp.eq.s32.totalorder %s25, 3
      %p253 = scmp.ne.s32.totalorder %s248, %s250
      %p254 = scmp.eq.s32.totalorder %s25, 0
      %p255 = por %p253, %p254
      %p256 = scmp.ne.s32.totalorder %s248, %s250
      %p257 = scmp.eq.s32.totalorder %s30, 3
      %p258 = por %p256, %p257
      %p259 = scmp.ne.s32.totalorder %s250, %s251
      %p260 = scmp.eq.s32.totalorder %s30, 0
      %p261 = por %p259, %p260
      %p262 = scmp.ne.s32.totalorder %s250, %s251
      %p263 = scmp.eq.s32.totalorder %s31, 3
      %p264 = por %p262, %p263
      %p266 = scmp.ne.s32.totalorder %s251, %s265
      %p267 = scmp.eq.s32.totalorder %s31, 0
      %p268 = por %p266, %p267
      %s270 = sadd.s32 %s269, 1
      %p273 = scmp.eq.s32.totalorder %s25, 3
      %p274 = scmp.ne.s32.totalorder %s269, %s271
      %p275 = scmp.eq.s32.totalorder %s25, 0
      %p276 = por %p274, %p275
      %p277 = scmp.ne.s32.totalorder %s269, %s271
      %p278 = scmp.eq.s32.totalorder %s30, 3
      %p279 = por %p277, %p278
      %p280 = scmp.ne.s32.totalorder %s271, %s272
      %p281 = scmp.eq.s32.totalorder %s30, 0
      %p282 = por %p280, %p281
      %p283 = scmp.ne.s32.totalorder %s271, %s272
      %p284 = scmp.eq.s32.totalorder %s31, 3
      %p285 = por %p283, %p284
      %p287 = scmp.ne.s32.totalorder %s272, %s286
      %p288 = scmp.eq.s32.totalorder %s31, 0
      %p289 = por %p287, %p288
      %s291 = sadd.s32 %s290, 1
      %p294 = scmp.eq.s32.totalorder %s25, 3
      %p295 = scmp.ne.s32.totalorder %s290, %s292
      %p296 = scmp.eq.s32.totalorder %s25, 0
      %p297 = por %p295, %p296
      %p298 = scmp.ne.s32.totalorder %s290, %s292
      %p299 = scmp.eq.s32.totalorder %s30, 3
      %p300 = por %p298, %p299
      %p301 = scmp.ne.s32.totalorder %s292, %s293
      %p302 = scmp.eq.s32.totalorder %s30, 0
      %p303 = por %p301, %p302
      %p304 = scmp.ne.s32.totalorder %s292, %s293
      %p305 = scmp.eq.s32.totalorder %s31, 3
      %p306 = por %p304, %p305
      %p308 = scmp.ne.s32.totalorder %s293, %s307
      %p309 = scmp.eq.s32.totalorder %s31, 0
      %p310 = por %p308, %p309
      %s311 = smul.u32 %s32, %s33
      %s312 = smul.u32 %s32, %s34
      %s313 = smul.u32 %s51, %s47
      %s314 = smul.u32 %s51, %s43
      %s315 = ssub.s32 %s311, %s313
      %s316 = ssub.s32 %s312, %s314
      %s317 = sor.u32 %s315, %s316
      %p318 = scmp.eq.s32.totalorder %s317, 0
      %s320 = sadd.s32 %s319, 1
      %s321 = scalar_select %p318, %s319, %s320
      %p324 = pneg %p318
      %p325 = scmp.eq.s32.totalorder %s25, 3
      %p326 = por %p324, %p325
      %p327 = scmp.ne.s32.totalorder %s319, %s322
      %p328 = scmp.eq.s32.totalorder %s25, 0
      %p329 = por %p327, %p328
      %p330 = scmp.ne.s32.totalorder %s319, %s322
      %p331 = scmp.eq.s32.totalorder %s30, 3
      %p332 = por %p330, %p331
      %p333 = scmp.ne.s32.totalorder %s322, %s323
      %p334 = scmp.eq.s32.totalorder %s30, 0
      %p335 = por %p333, %p334
      %p336 = scmp.ne.s32.totalorder %s322, %s323
      %p337 = scmp.eq.s32.totalorder %s31, 3
      %p338 = por %p336, %p337
      %p340 = scmp.ne.s32.totalorder %s323, %s339
      %p341 = scmp.eq.s32.totalorder %s31, 0
      %p342 = por %p340, %p341
      %p343 = scmp.le.s32.totalorder 1, %s25
      %p344 = scmp.lt.s32.totalorder %s25, 5
      %p345 = pnand %p343, %p344
      %p346 = pneg %p345
      // Predicated region
      $region9: #{tpu_custom_call.1} parent=5 // pred_check
        _
      $region10: #{tpu_custom_call.1} parent=5 // pred_check_branch
        %348 = sbr.rel (%p345) target = $region12
      $region11: #{tpu_custom_call.1} parent=5 // pred_region
        %s349 = ssub.s32 %s25, 1
        // Predicated region
        $region13: #{tpu_custom_call.1} parent=11 // pred_check
          %p350 = pneg %p65
        $region14: #{tpu_custom_call.1} parent=11 // pred_check_branch
          %352 = sbr.rel (%p350) target = $region16
        $region15: #{tpu_custom_call.1} parent=11 // pred_region
          %354 = vsyncadd [#allocation11], 0
          %s356 = sshll.u32 %s0, 4
          %s357 = int_to_ptr.vmem [resolvable:$true] %s356
          %359 = dma.vmem_to_smem %s357, 16, [#allocation8], [#allocation11]
        $region16: #{tpu_custom_call.1} parent=11 // pred_fallthru
          _
        // Predicated region
        $region17: #{tpu_custom_call.1} parent=11 // pred_check
          %p360 = pneg %p114
        $region18: #{tpu_custom_call.1} parent=11 // pred_check_branch
          %362 = sbr.rel (%p360) target = $region20
        $region19: #{tpu_custom_call.1} parent=11 // pred_region
          _
        $region20: #{tpu_custom_call.1} parent=11 // pred_fallthru
          _
        // Predicated region
        $region21: #{tpu_custom_call.1} parent=11 // pred_check
          %p363 = pneg %p135
        $region22: #{tpu_custom_call.1} parent=11 // pred_check_branch
          %365 = sbr.rel (%p363) target = $region24
        $region23: #{tpu_custom_call.1} parent=11 // pred_region
          _
        $region24: #{tpu_custom_call.1} parent=11 // pred_fallthru
          _
        // Predicated region
        $region25: #{tpu_custom_call.1} parent=11 // pred_check
          %p366 = pneg %p156
        $region26: #{tpu_custom_call.1} parent=11 // pred_check_branch
          %368 = sbr.rel (%p366) target = $region28
        $region27: #{tpu_custom_call.1} parent=11 // pred_region
          _
        $region28: #{tpu_custom_call.1} parent=11 // pred_fallthru
          _
        // Predicated region
        $region29: #{tpu_custom_call.1} parent=11 // pred_check
          %p369 = pneg %p177
        $region30: #{tpu_custom_call.1} parent=11 // pred_check_branch
          %371 = sbr.rel (%p369) target = $region32
        $region31: #{tpu_custom_call.1} parent=11 // pred_region
          _
        $region32: #{tpu_custom_call.1} parent=11 // pred_fallthru
          _
        // Predicated region
        $region33: #{tpu_custom_call.1} parent=11 // pred_check
          %p372 = pneg %p198
        $region34: #{tpu_custom_call.1} parent=11 // pred_check_branch
          %374 = sbr.rel (%p372) target = $region36
        $region35: #{tpu_custom_call.1} parent=11 // pred_region
          _
        $region36: #{tpu_custom_call.1} parent=11 // pred_fallthru
          _
        // Predicated region
        $region37: #{tpu_custom_call.1} parent=11 // pred_check
          %p375 = pneg %p219
        $region38: #{tpu_custom_call.1} parent=11 // pred_check_branch
          %377 = sbr.rel (%p375) target = $region40
        $region39: #{tpu_custom_call.1} parent=11 // pred_region
          _
        $region40: #{tpu_custom_call.1} parent=11 // pred_fallthru
          _
        // Predicated region
        $region41: #{tpu_custom_call.1} parent=11 // pred_check
          %p378 = pneg %p240
        $region42: #{tpu_custom_call.1} parent=11 // pred_check_branch
          %380 = sbr.rel (%p378) target = $region44
        $region43: #{tpu_custom_call.1} parent=11 // pred_region
          _
        $region44: #{tpu_custom_call.1} parent=11 // pred_fallthru
          _
        // Predicated region
        $region45: #{tpu_custom_call.1} parent=11 // pred_check
          %p381 = pneg %p261
        $region46: #{tpu_custom_call.1} parent=11 // pred_check_branch
          %383 = sbr.rel (%p381) target = $region48
        $region47: #{tpu_custom_call.1} parent=11 // pred_region
          _
        $region48: #{tpu_custom_call.1} parent=11 // pred_fallthru
          _
        // Predicated region
        $region49: #{tpu_custom_call.1} parent=11 // pred_check
          %p384 = pneg %p282
        $region50: #{tpu_custom_call.1} parent=11 // pred_check_branch
          %386 = sbr.rel (%p384) target = $region52
        $region51: #{tpu_custom_call.1} parent=11 // pred_region
          _
        $region52: #{tpu_custom_call.1} parent=11 // pred_fallthru
          _
        // Predicated region
        $region53: #{tpu_custom_call.1} parent=11 // pred_check
          %p387 = pneg %p303
        $region54: #{tpu_custom_call.1} parent=11 // pred_check_branch
          %389 = sbr.rel (%p387) target = $region56
        $region55: #{tpu_custom_call.1} parent=11 // pred_region
          _
        $region56: #{tpu_custom_call.1} parent=11 // pred_fallthru
          _
      $region12: #{tpu_custom_call.1} parent=5 // pred_fallthru
        _
      %p390 = scmp.lt.s32.totalorder %s25, 4
      // Predicated region
      $region57: #{tpu_custom_call.1} parent=5 // pred_check
        %p391 = pneg %p390
      $region58: #{tpu_custom_call.1} parent=5 // pred_check_branch
        %393 = sbr.rel (%p391) target = $region60
      $region59: #{tpu_custom_call.1} parent=5 // pred_region
        // Predicated region
        $region61: #{tpu_custom_call.1} parent=59 // pred_check
          %p394 = pneg %p87
        $region62: #{tpu_custom_call.1} parent=59 // pred_check_branch
          %396 = sbr.rel (%p394) target = $region64
        $region63: #{tpu_custom_call.1} parent=59 // pred_region
          %s397 = sand.u32 %s77, 1
          %s398 = scalar_lea.sflag [#allocation9], %s397
          %s399 = sand.u32 %s77, 1
          %s400 = smul.addr %s399, 8
          %s401 = scalar_lea.vmem [#allocation12], %s400
          %s402 = smul.u32 2, %s34
          %404 = vsyncadd %s398, 0
          %s405 = smul.addr %s33, 2
          %s406 = sadd.s32 %s402, %s405
          %s407 = smul.addr %s406, 4
          %s408 = scalar_lea.hbm %s1, %s407
          %s410 = sshll.u32 %s408, 4
          %s411 = int_to_ptr.hbm [resolvable:$true] %s410
          %s412 = sshll.u32 %s401, 4
          %s413 = int_to_ptr.vmem [resolvable:$true] %s412
          %415 = dma.hbm_to_vmem [thread:$0]  %s411, 128, %s413, %s398
        $region64: #{tpu_custom_call.1} parent=59 // pred_fallthru
          _
      $region60: #{tpu_custom_call.1} parent=5 // pred_fallthru
        _
      %p416 = scmp.le.s32.totalorder 1, %s25
      %p417 = scmp.lt.s32.totalorder %s25, 5
      %p418 = pnand %p416, %p417
      %p419 = pneg %p418
      // Predicated region
      $region65: #{tpu_custom_call.1} parent=5 // pred_check
        _
      $region66: #{tpu_custom_call.1} parent=5 // pred_check_branch
        %421 = sbr.rel (%p418) target = $region68
      $region67: #{tpu_custom_call.1} parent=5 // pred_region
        %s422 = ssub.s32 %s25, 1
        // Predicated region
        $region69: #{tpu_custom_call.1} parent=67 // pred_check
          %p423 = pneg %p65
        $region70: #{tpu_custom_call.1} parent=67 // pred_check_branch
          %425 = sbr.rel (%p423) target = $region72
        $region71: #{tpu_custom_call.1} parent=67 // pred_region
          %427 = dma.done [#allocation11], 16
        $region72: #{tpu_custom_call.1} parent=67 // pred_fallthru
          _
        %s428 = sand.u32 %s80, 1
        %s429 = scalar_lea.sflag [#allocation9], %s428
        %s430 = sand.u32 %s80, 1
        %s431 = smul.addr %s430, 8
        %s432 = scalar_lea.vmem [#allocation12], %s431
        // Predicated region
        $region73: #{tpu_custom_call.1} parent=67 // pred_check
          %p433 = pneg %p93
        $region74: #{tpu_custom_call.1} parent=67 // pred_check_branch
          %435 = sbr.rel (%p433) target = $region76
        $region75: #{tpu_custom_call.1} parent=67 // pred_region
          %437 = dma.done %s429, 128
        $region76: #{tpu_custom_call.1} parent=67 // pred_fallthru
          _
        %438 = sfence
        %p439 = pneg %p65
        %p440 = pneg %p62
        %s441 = sand.u32 %s80, 1
        %s442 = scalar_lea.sflag [#allocation9], %s441
        %s443 = sand.u32 %s80, 1
        %s444 = smul.addr %s443, 8
        %s445 = scalar_lea.vmem [#allocation12], %s444
        %p446 = pneg %p93
        %p447 = pneg %p90
        %p448 = pneg %p114
        %p449 = pneg %p111
        %p450 = pneg %p135
        %p451 = pneg %p132
        %p452 = pneg %p156
        %p453 = pneg %p153
        %p454 = pneg %p177
        %p455 = pneg %p174
        %p456 = pneg %p198
        %p457 = pneg %p195
        %p458 = pneg %p219
        %p459 = pneg %p216
        %p460 = pneg %p240
        %p461 = pneg %p237
        %p462 = pneg %p261
        %p463 = pneg %p258
        %p464 = pneg %p282
        %p465 = pneg %p279
        %p466 = pneg %p303
        %p467 = pneg %p300
        %p468 = pneg %p335
        %p469 = pneg %p332
        %s470 = sand.u32 %s322, 1
        %s471 = scalar_lea.sflag [#allocation10], %s470
        %s472 = sand.u32 %s322, 1
        %s473 = smul.addr %s472, 8
        %s474 = scalar_lea.vmem [#allocation13], %s473
        %s475 = smul.u32 2, %s37
        %s476 = smul.u32 %s35, %s36
        %s477 = smul.u32 %s35, %s37
        %s478 = smul.u32 2, %s477
        %p479 = scmp.eq.s32.totalorder %s35, 0
        // Predicated region
        $region77: #{tpu_custom_call.1} parent=67 // pred_check
          %p480 = pneg %p479
        $region78: #{tpu_custom_call.1} parent=67 // pred_check_branch
          %482 = sbr.rel (%p480) target = $region80
        $region79: #{tpu_custom_call.1} parent=67 // pred_region
          %p483 = scmp.eq.s32.totalorder %s36, 0
          %p484 = scmp.eq.s32.totalorder %s37, 0
          %p485 = pnand %p483, %p484
          %p486 = pneg %p485
          // Predicated region
          $region81: #{tpu_custom_call.1} parent=79 // pred_check
            _
          $region82: #{tpu_custom_call.1} parent=79 // pred_check_branch
            %488 = sbr.rel (%p485) target = $region84
          $region83: #{tpu_custom_call.1} parent=79 // pred_region
            %489 = vst [vmem:[#allocation2] sm:$0xff] 0.0
            %490 = vst [vmem:[#allocation3] sm:$0xff] 0.0
          $region84: #{tpu_custom_call.1} parent=79 // pred_fallthru
            _
          %v491 = vld [vmem:[%s432] sm:$0xff]
          %v492 = vld [vmem:[#allocation2] sm:$0xff]
          %v493 = vadd.f32 %v492, %v491
          %494 = vst [vmem:[#allocation2] sm:$0xff] %v493
          %v495 = vld [vmem:[#allocation3] sm:$0xff]
          %v496 = vmul.f32 %v491, %v491
          %v497 = vadd.f32 %v495, %v496
          %498 = vst [vmem:[#allocation3] sm:$0xff] %v497
          %p499 = scmp.eq.s32.totalorder %s36, 1
          %p500 = pnand %p499, %p484
          %p501 = pneg %p500
          // Predicated region
          $region85: #{tpu_custom_call.1} parent=79 // pred_check
            _
          $region86: #{tpu_custom_call.1} parent=79 // pred_check_branch
            %503 = sbr.rel (%p500) target = $region88
          $region87: #{tpu_custom_call.1} parent=79 // pred_region
            %v504 = vld [vmem:[#allocation2] sm:$0xff]
            %506 = vst [vmem:[#allocation1] ss:$2 sm:$0xff] %v504
            %v507 = vld.sshfl [vmem:[#allocation1] sm:$0xff pattern:$0x75316420]
            %v508 = vld.sshfl [vmem:[#allocation1 + $0x8] sm:$0xff pattern:$0x75316420]
            %vm511 = vcmask 1043456
            %v512 = vsel %vm511, %v507, 0.0
            %v513 = vsel %vm511, %v508, 0.0
            %v514 = vadd.f32 %v512, %v513
            %515 = vadd.xlane.f32.xlu0 %v514
            %v516 = vpop.xlane.xlu0 %515
            %v517 = vld [vmem:[#allocation3] sm:$0xff]
            %519 = vst [vmem:[#allocation1] ss:$2 sm:$0xff] %v517
            %v520 = vld.sshfl [vmem:[#allocation1] sm:$0xff pattern:$0x75316420]
            %v521 = vld.sshfl [vmem:[#allocation1 + $0x8] sm:$0xff pattern:$0x75316420]
            %v524 = vsel %vm511, %v520, 0.0
            %v525 = vsel %vm511, %v521, 0.0
            %v526 = vadd.f32 %v524, %v525
            %527 = vadd.xlane.f32.xlu0 %v526
            %v528 = vpop.xlane.xlu0 %527
            %v529 = vmul.f32 %v516, 0.001953125
            %v530 = vmul.f32 %v528, 0.001953125
            %v531 = vmul.f32 %v529, %v529
            %v532 = vsub.f32 %v530, %v531
            %v533 = vmax.f32 %v532, 0.0
            %v534 = vadd.f32 %v533, 1e-05
            %v535 = vrsqrt.pop %v534
            %v536 = vmul.f32 %v535, %v534
            %v537 = vmul.f32 %v536, %v535
            %v538 = vmul.f32 0.5, %v537
            %v539 = vsub.f32 1.5, %v538
            %v540 = vmul.f32 %v535, %v539
            %vm541 = vweird.f32 %v534
            %vm542 = vweird.f32 %v535
            %vm543 = vmor %vm541, %vm542
            %v544 = vsel %vm543, %v535, %v540
            %v545 = vld [vmem:[%s2] sm:$0xf]
            %v546 = vmul.f32 %v544, %v545
            %vm547 = vcmask 3072
            %548 = vst.msk [vmem:[#allocation4] sm:$0xf] %vm547, %v546
            %v549 = vld [vmem:[%s3] sm:$0xf]
            %v550 = vmul.f32 %v529, %v546
            %v551 = vsub.f32 %v549, %v550
            %552 = vst.msk [vmem:[#allocation5] sm:$0xf] %vm547, %v551
          $region88: #{tpu_custom_call.1} parent=79 // pred_fallthru
            _
        $region80: #{tpu_custom_call.1} parent=67 // pred_fallthru
          _
        %p553 = scmp.eq.s32.totalorder %s35, 1
        // Predicated region
        $region89: #{tpu_custom_call.1} parent=67 // pred_check
          %p554 = pneg %p553
        $region90: #{tpu_custom_call.1} parent=67 // pred_check_branch
          %556 = sbr.rel (%p554) target = $region92
        $region91: #{tpu_custom_call.1} parent=67 // pred_region
          %p557 = scmp.eq.s32.totalorder %s37, 0
          // Predicated region
          $region93: #{tpu_custom_call.1} parent=91 // pred_check
            %p558 = pneg %p557
          $region94: #{tpu_custom_call.1} parent=91 // pred_check_branch
            %560 = sbr.rel (%p558) target = $region96
          $region95: #{tpu_custom_call.1} parent=91 // pred_region
            %s561 = sld [smem:[#allocation8 + %s36]]
            %v562 = vld [vmem:[%s4] sm:$0x1]
            %v563 = vstv %s561
            %v564 = vmul.f32 %v562, %v563
            %v565 = vld [vmem:[%s5] sm:$0x1]
            %v566 = vadd.f32 %v564, %v565
            %v567 = vld [vmem:[%s8] sm:$0x1]
            %v568 = vmul.f32 %v567, %v563
            %v569 = vld [vmem:[%s9] sm:$0x1]
            %v570 = vadd.f32 %v568, %v569
            %v571 = vld [vmem:[%s6] sm:$0xf]
            %v573 = vperm.slane %v566, 0
            %v575 = vmul.f32 %v571, %v573
            %vm576 = vcmask 1043456
            %v577 = vsel %vm576, %v575, 0.0
            %578 = vadd.xlane.f32.xlu0 %v577
            %v579 = vpop.xlane.xlu0 %578
            %v580 = vld [vmem:[%s7] sm:$0xf]
            %v581 = vadd.f32 %v579, %v580
            %v582 = vld [vmem:[%s10] sm:$0xf]
            %v584 = vperm.slane %v570, 0
            %v586 = vmul.f32 %v582, %v584
            %v587 = vsel %vm576, %v586, 0.0
            %588 = vadd.xlane.f32.xlu0 %v587
            %v589 = vpop.xlane.xlu0 %588
            %v590 = vld [vmem:[%s11] sm:$0xf]
            %v591 = vadd.f32 %v589, %v590
            %v592 = vld [vmem:[#allocation4] sm:$0xf]
            %v593 = vmul.f32 %v592, %v581
            %vm594 = vcmask 3072
            %595 = vst.msk [vmem:[#allocation6] sm:$0xf] %vm594, %v593
            %v596 = vld [vmem:[#allocation5] sm:$0xf]
            %v597 = vmul.f32 %v596, %v581
            %v598 = vadd.f32 %v597, %v591
            %599 = vst.msk [vmem:[#allocation7] sm:$0xf] %vm594, %v598
          $region96: #{tpu_custom_call.1} parent=91 // pred_fallthru
            _
          %v600 = vld [vmem:[%s432] sm:$0xff]
          %v601 = vld [vmem:[#allocation6] sm:$0xf]
          %603 = vset.pattern.permute.xlu0 0
          %604 = vperm.xlu0 %603, %v601
          %v605 = vpop.permute.xlu0 %604
          %v607 = vunpack.c.l.s4 839922192
          %v608 = vunpack.c.0.s8 %v607
          %v609 = vperm.slane %v605, %v608
          %v611 = vmul.f32 %v600, %v609
          %v612 = vld [vmem:[#allocation7] sm:$0xf]
          %614 = vset.pattern.permute.xlu0 0
          %615 = vperm.xlu0 %614, %v612
          %v616 = vpop.permute.xlu0 %615
          %v618 = vunpack.c.l.s4 839922192
          %v619 = vunpack.c.0.s8 %v618
          %v620 = vperm.slane %v616, %v619
          %v622 = vadd.f32 %v611, %v620
          %623 = vst [vmem:[%s474] sm:$0xff] %v622
        $region92: #{tpu_custom_call.1} parent=67 // pred_fallthru
          _
        %s624 = sand.u32 %s322, 1
        %s625 = scalar_lea.sflag [#allocation10], %s624
        %s626 = sand.u32 %s322, 1
        %s627 = smul.addr %s626, 8
        %s628 = scalar_lea.vmem [#allocation13], %s627
        // Predicated region
        $region97: #{tpu_custom_call.1} parent=67 // pred_check
          %p629 = pneg %p332
        $region98: #{tpu_custom_call.1} parent=67 // pred_check_branch
          %631 = sbr.rel (%p629) target = $region100
        $region99: #{tpu_custom_call.1} parent=67 // pred_region
          %s632 = smul.u32 %s35, %s36
          %s633 = smul.u32 %s35, %s37
          %s634 = smul.u32 2, %s633
          %636 = vsyncadd %s625, 0
          %s637 = smul.addr %s632, 2
          %s638 = sadd.s32 %s634, %s637
          %s639 = smul.addr %s638, 4
          %s640 = scalar_lea.hbm %s12, %s639
          %s642 = sshll.u32 %s628, 4
          %s643 = int_to_ptr.vmem [resolvable:$true] %s642
          %s644 = sshll.u32 %s640, 4
          %s645 = int_to_ptr.hbm [resolvable:$true] %s644
          %647 = dma.vmem_to_hbm [thread:$0]  %s643, 128, %s645, %s625
        $region100: #{tpu_custom_call.1} parent=67 // pred_fallthru
          _
      $region68: #{tpu_custom_call.1} parent=5 // pred_fallthru
        _
      %p648 = scmp.le.s32.totalorder 2, %s25
      // Predicated region
      $region101: #{tpu_custom_call.1} parent=5 // pred_check
        %p649 = pneg %p648
      $region102: #{tpu_custom_call.1} parent=5 // pred_check_branch
        %651 = sbr.rel (%p649) target = $region104
      $region103: #{tpu_custom_call.1} parent=5 // pred_region
        %s652 = ssub.s32 %s25, 2
        // Predicated region
        $region105: #{tpu_custom_call.1} parent=103 // pred_check
          %p653 = pneg %p338
        $region106: #{tpu_custom_call.1} parent=103 // pred_check_branch
          %655 = sbr.rel (%p653) target = $region108
        $region107: #{tpu_custom_call.1} parent=103 // pred_region
          %s656 = sand.u32 %s323, 1
          %s657 = scalar_lea.sflag [#allocation10], %s656
          %s658 = sand.u32 %s323, 1
          %s659 = smul.addr %s658, 8
          %s660 = scalar_lea.vmem [#allocation13], %s659
          %662 = dma.done %s657, 128
        $region108: #{tpu_custom_call.1} parent=103 // pred_fallthru
          _
      $region104: #{tpu_custom_call.1} parent=5 // pred_fallthru
        _
    $region6: #{tpu_custom_call.1} parent=1 // loop_footer
      %s29 = sadd.s32 1, %s25
    $region7: #{tpu_custom_call.1} parent=1 // loop_footer_branch
      %24 = sbr.rel target = $region3
    $region8: #{tpu_custom_call.1} parent=1 // loop_exit
      _
    %663 = vsyncpa [#allocation9], 1
    %s664 = scalar_lea.sflag [#allocation9], 1
    %665 = vsyncpa %s664, 1
    %666 = vsyncpa [#allocation10], 1
    %s667 = scalar_lea.sflag [#allocation10], 1
    %668 = vsyncpa %s667, 1
    %669 = vsyncpa [#allocation11], 1
    %s670 = scalar_lea.sflag [#allocation11], 1
    %671 = vsyncpa %s670, 1

</llo_original>
